<compile_context>
chip_gen: v5e
topology: v5e:2x2
jax: 0.10.0
libtpu: 0.0.40
codegen_flags: <defaults>
</compile_context>

<pallas_src>
import jax
import jax.numpy as jnp
from jax.experimental import pallas as pl
from jax.experimental.pallas import tpu as pltpu


def edge_attention_kernel(embs_ref, w1_ref, b1_ref, w2_ref, b2_ref,
                          wot_ref, bo_ref, gamma_ref, beta_ref, out_ref):
    E = embs_ref.shape[0]

    # Load each edge-type tile once and upcast: bf16 at the HBM boundary,
    # f32 for all elementwise / EUP / MXU-accumulate math.
    xs = [embs_ref[e].astype(jnp.float32) for e in range(E)]        # E x [tn, H]

    # Per-edge-type scorer: score_e = tanh(x_e @ W1_e^T + b1_e) @ w2_e + b2_e.
    # Both H-reductions run on the MXU (no cross-lane XLU reduce in the loop);
    # b2 is read as scalars from SMEM.
    scores = []
    for e in range(E):                      # E is small & static -> unrolled
        h_e = jnp.tanh(
            jnp.dot(xs[e], w1_ref[e], preferred_element_type=jnp.float32)
            + b1_ref[e])                                             # [tn, H]
        s_e = (jnp.dot(h_e, w2_ref[e], preferred_element_type=jnp.float32)
               + b2_ref[e])                                          # [tn, 1]
        scores.append(s_e)
    # TODO(synk): Dropout layers are inference-mode identities here (no RNG mask).

    # Softmax over edge types.  The softmax axis is the unrolled E axis, so the
    # max / exp / sum chain is purely elementwise over E small [tn, 1] columns.
    m = scores[0]
    for e in range(1, E):
        m = jnp.maximum(m, scores[e])
    ps = [jnp.exp(s - m) for s in scores]
    denom = ps[0]
    for e in range(1, E):
        denom = denom + ps[e]
    inv = pl.reciprocal(denom, approx=False)   # exact: kernel is memory-bound

    # Attention-weighted fusion of the edge-type embeddings ([tn,1] -> [tn,H]
    # lane broadcast is unavoidable here and cheap at this size).
    fused = xs[0] * (ps[0] * inv)
    for e in range(1, E):
        fused = fused + xs[e] * (ps[e] * inv)                        # [tn, H]

    # Output transform: Linear -> LayerNorm -> ReLU (Dropout = identity).
    z = (jnp.dot(fused, wot_ref[...], preferred_element_type=jnp.float32)
         + bo_ref[...])                                              # [tn, H]
    # One-pass LN stats: mean and mean-of-squares (independent reduces).
    mu = jnp.mean(z, axis=-1, keepdims=True)
    ms = jnp.mean(z * z, axis=-1, keepdims=True)
    zn = (z - mu) * jax.lax.rsqrt(ms - mu * mu + 1e-5)
    y = zn * gamma_ref[...] + beta_ref[...]
    out_ref[...] = jnp.maximum(y, 0.0).astype(out_ref.dtype)
    # NOTE: rows past N in a partial final tile may flow Inf/NaN through
    # tanh/exp, but all math is row-local and padding rows are never
    # committed, so this is benign.


def _round_up(x, m):
    return ((x + m - 1) // m) * m


def _num_tensorcores():
    """Best-effort TensorCores-per-chip (v7x: 2, v5e/v6e: 1). Never raises."""
    try:
        info = pltpu.get_tpu_info()
    except Exception:
        return 1
    for name in ("num_cores", "core_count", "num_tensorcores",
                 "tensorcore_count", "cores_per_chip"):
        v = getattr(info, name, None)
        if isinstance(v, int) and v > 0:
            return v
    return 1


def _choose_tile_n(N, tile_n, n_cores, gran):
    """Largest node tile <= tile_n (multiple of `gran`); on multi-TC chips
    prefer an even number of grid steps so the parallel axis load-balances."""
    tn = _round_up(min(tile_n, _round_up(N, gran)), gran)
    if n_cores > 1:
        steps = pl.cdiv(N, tn)
        if steps % 2 == 1 and N >= 2 * gran:
            steps += 1
            tn = _round_up(pl.cdiv(N, steps), gran)
    return max(tn, gran)


def edge_level_attention(embs, packed, *, tile_n=1024):
    """embs: [E, N, H] stacked edge-type embeddings (float32 or bfloat16)."""
    E, N, H = embs.shape
    w1t, b1, w2c, b2, wot, bo, gamma, beta = packed

    gran = 8 if embs.dtype.itemsize == 4 else 16        # sublane packing
    tn = _choose_tile_n(N, tile_n, _num_tensorcores(), gran)
    grid = (pl.cdiv(N, tn),)

    full3 = lambda i: (0, 0, 0)
    full2 = lambda i: (0, 0)

    return pl.pallas_call(
        edge_attention_kernel,
        out_shape=jax.ShapeDtypeStruct((N, H), jnp.float32),
        grid_spec=pltpu.PrefetchScalarGridSpec(
            num_scalar_prefetch=0,
            grid=grid,
            in_specs=[
                pl.BlockSpec((E, tn, H), lambda i: (0, i, 0)),       # embs [E,N,H], no host transpose
                pl.BlockSpec((E, H, H), full3),                      # per-edge W1^T
                pl.BlockSpec((E, 1, H), full3),                      # per-edge b1
                pl.BlockSpec((E, H, 1), full3),                      # per-edge w2 column
                pl.BlockSpec(memory_space=pltpu.MemorySpace.SMEM),   # b2 scalars
                pl.BlockSpec((H, H), full2),                         # Wo^T
                pl.BlockSpec((1, H), full2),                         # bo
                pl.BlockSpec((1, H), full2),                         # LN gamma
                pl.BlockSpec((1, H), full2),                         # LN beta
            ],
            out_specs=pl.BlockSpec((tn, H), lambda i: (i, 0)),
        ),
        compiler_params=pltpu.CompilerParams(
            dimension_semantics=("parallel",)),
    )(embs, w1t, b1, w2c, b2, wot, bo, gamma, beta)


def init_raw_params(key, E, H):
    ks = jax.random.split(key, 6)
    scale = 1.0 / jnp.sqrt(H)
    w1 = jax.random.normal(ks[0], (E, H, H), jnp.float32) * scale   # Linear(H,H).weight
    b1 = jax.random.normal(ks[1], (E, H), jnp.float32) * 0.1
    w2 = jax.random.normal(ks[2], (E, H), jnp.float32) * scale      # Linear(H,1).weight (row)
    b2 = jax.random.normal(ks[3], (E,), jnp.float32) * 0.1
    wo = jax.random.normal(ks[4], (H, H), jnp.float32) * scale      # output Linear weight
    bo = jax.random.normal(ks[5], (H,), jnp.float32) * 0.1
    gamma = jnp.ones((H,), jnp.float32)
    beta = jnp.zeros((H,), jnp.float32)
    return (w1, b1, w2, b2, wo, bo, gamma, beta)


def pack_params(raw):
    """Host-side packing (tiny weights, one-time): pre-transposed per-edge W1,
    per-edge w2 columns, flattened biases."""
    w1, b1, w2, b2, wo, bo, gamma, beta = raw
    E, H, _ = w1.shape
    w1t = jnp.transpose(w1, (0, 2, 1))                  # x_e @ w1t[e] == x_e @ W1_e^T
    b1r = b1.reshape(E, 1, H)
    w2c = w2.reshape(E, H, 1)
    return (w1t, b1r, w2c, b2.astype(jnp.float32),
            wo.T, bo.reshape(1, H), gamma.reshape(1, H), beta.reshape(1, H))


def reference(embs, raw):
    """Pure-JAX reference matching the PyTorch forward (eval mode)."""
    w1, b1, w2, b2, wo, bo, gamma, beta = raw
    E, N, H = embs.shape
    scores = []
    for e in range(E):
        h = jnp.tanh(embs[e] @ w1[e].T + b1[e])
        scores.append(h @ w2[e][:, None] + b2[e])
    sc = jnp.concatenate(scores, axis=1)
    attn = jax.nn.softmax(sc, axis=1)
    fused = jnp.zeros((N, H), jnp.float32)
    for e in range(E):
        fused = fused + embs[e] * attn[:, e:e + 1]
    z = fused @ wo.T + bo
    mu = jnp.mean(z, axis=-1, keepdims=True)
    var = jnp.mean((z - mu) ** 2, axis=-1, keepdims=True)
    y = (z - mu) / jnp.sqrt(var + 1e-5) * gamma + beta
    return jnp.maximum(y, 0.0)


if __name__ == "__main__":
    E, N, H = 3, 64, 32          # 3 edge types, 64 nodes, hidden_dim=32
    key = jax.random.PRNGKey(0)
    k_emb, k_par = jax.random.split(key)

    # Producer emits bf16 embeddings (halves the HBM read of the dominant
    # input); the kernel upcasts to f32 on load, so the reference sees the
    # exact same (bf16-rounded) values.
    embs = jax.random.normal(k_emb, (E, N, H), jnp.float32).astype(jnp.bfloat16)
    raw = init_raw_params(k_par, E, H)
    packed = pack_params(raw)

    out = jax.block_until_ready(edge_level_attention(embs, packed))

    ref = reference(embs.astype(jnp.float32), raw)
    assert out.shape == (N, H)
    assert jnp.allclose(out, ref, rtol=1e-3, atol=1e-3), "mismatch vs reference"
    print("KERNEL_OK")
</pallas_src>

<mosaic_0001>
module attributes {stable_mosaic.version = 11 : i64} {
  func.func @edge_attention_kernel(%arg0: i32, %arg1: memref<3x64x32xbf16, #tpu.memory_space<vmem>>, %arg2: memref<3x32x32xf32, #tpu.memory_space<vmem>>, %arg3: memref<3x1x32xf32, #tpu.memory_space<vmem>>, %arg4: memref<3x32x1xf32, #tpu.memory_space<vmem>>, %arg5: memref<3xf32, #tpu.memory_space<smem>>, %arg6: memref<32x32xf32, #tpu.memory_space<vmem>>, %arg7: memref<1x32xf32, #tpu.memory_space<vmem>>, %arg8: memref<1x32xf32, #tpu.memory_space<vmem>>, %arg9: memref<1x32xf32, #tpu.memory_space<vmem>>, %arg10: memref<64x32xf32, #tpu.memory_space<vmem>>) attributes {dimension_semantics = [#tpu.dimension_semantics<parallel>], iteration_bounds = array<i64: 1>, scalar_prefetch = 0 : i64, scratch_operands = 0 : i64, tpu.core_type = #tpu.core_type<tc>, window_params = [{transform_indices = @transform_0, window_bounds = array<i64: 3, 64, 32>}, {pipeline_mode = #tpu.pipeline_mode<synchronous>, transform_indices = @transform_1, window_bounds = array<i64: 3, 32, 32>}, {pipeline_mode = #tpu.pipeline_mode<synchronous>, transform_indices = @transform_2, window_bounds = array<i64: 3, 1, 32>}, {pipeline_mode = #tpu.pipeline_mode<synchronous>, transform_indices = @transform_3, window_bounds = array<i64: 3, 32, 1>}, {transform_indices = @transform_4, window_bounds = array<i64: 3>}, {pipeline_mode = #tpu.pipeline_mode<synchronous>, transform_indices = @transform_5, window_bounds = array<i64: 32, 32>}, {pipeline_mode = #tpu.pipeline_mode<synchronous>, transform_indices = @transform_6, window_bounds = array<i64: 1, 32>}, {pipeline_mode = #tpu.pipeline_mode<synchronous>, transform_indices = @transform_7, window_bounds = array<i64: 1, 32>}, {pipeline_mode = #tpu.pipeline_mode<synchronous>, transform_indices = @transform_8, window_bounds = array<i64: 1, 32>}, {transform_indices = @transform_9, window_bounds = array<i64: 64, 32>}]} {
    %c0 = arith.constant 0 : index
    %c0_0 = arith.constant 0 : index
    %c0_1 = arith.constant 0 : index
    %0 = vector.load %arg1[%c0, %c0_0, %c0_1] : memref<3x64x32xbf16, #tpu.memory_space<vmem>>, vector<1x64x32xbf16>
    %1 = vector.shape_cast %0 : vector<1x64x32xbf16> to vector<64x32xbf16>
    %2 = arith.extf %1 : vector<64x32xbf16> to vector<64x32xf32>
    %c1 = arith.constant 1 : index
    %c0_2 = arith.constant 0 : index
    %c0_3 = arith.constant 0 : index
    %3 = vector.load %arg1[%c1, %c0_2, %c0_3] : memref<3x64x32xbf16, #tpu.memory_space<vmem>>, vector<1x64x32xbf16>
    %4 = vector.shape_cast %3 : vector<1x64x32xbf16> to vector<64x32xbf16>
    %5 = arith.extf %4 : vector<64x32xbf16> to vector<64x32xf32>
    %c2 = arith.constant 2 : index
    %c0_4 = arith.constant 0 : index
    %c0_5 = arith.constant 0 : index
    %6 = vector.load %arg1[%c2, %c0_4, %c0_5] : memref<3x64x32xbf16, #tpu.memory_space<vmem>>, vector<1x64x32xbf16>
    %7 = vector.shape_cast %6 : vector<1x64x32xbf16> to vector<64x32xbf16>
    %8 = arith.extf %7 : vector<64x32xbf16> to vector<64x32xf32>
    %c0_6 = arith.constant 0 : index
    %c0_7 = arith.constant 0 : index
    %c0_8 = arith.constant 0 : index
    %9 = vector.load %arg2[%c0_6, %c0_7, %c0_8] : memref<3x32x32xf32, #tpu.memory_space<vmem>>, vector<1x32x32xf32>
    %10 = vector.shape_cast %9 : vector<1x32x32xf32> to vector<32x32xf32>
    %cst = arith.constant dense<0.000000e+00> : vector<64x32xf32>
    %11 = tpu.matmul %2, %10, %cst {dimension_numbers = #tpu.dot_dimension_numbers<[1], [0], [0], [1], [0, 0, 1, 1], [], []>} : vector<64x32xf32>, vector<32x32xf32>, vector<64x32xf32> -> vector<64x32xf32>
    %c0_9 = arith.constant 0 : index
    %c0_10 = arith.constant 0 : index
    %c0_11 = arith.constant 0 : index
    %12 = vector.load %arg3[%c0_9, %c0_10, %c0_11] : memref<3x1x32xf32, #tpu.memory_space<vmem>>, vector<1x1x32xf32>
    %13 = vector.shape_cast %12 : vector<1x1x32xf32> to vector<1x32xf32>
    %14 = vector.broadcast %13 : vector<1x32xf32> to vector<64x32xf32>
    %15 = arith.addf %11, %14 : vector<64x32xf32>
    %16 = math.tanh %15 : vector<64x32xf32>
    %c0_12 = arith.constant 0 : index
    %c0_13 = arith.constant 0 : index
    %c0_14 = arith.constant 0 : index
    %17 = vector.load %arg4[%c0_12, %c0_13, %c0_14] : memref<3x32x1xf32, #tpu.memory_space<vmem>>, vector<1x32x1xf32>
    %18 = vector.shape_cast %17 : vector<1x32x1xf32> to vector<32x1xf32>
    %cst_15 = arith.constant dense<0.000000e+00> : vector<64x1xf32>
    %19 = tpu.matmul %16, %18, %cst_15 {dimension_numbers = #tpu.dot_dimension_numbers<[1], [0], [0], [1], [0, 0, 1, 1], [], []>} : vector<64x32xf32>, vector<32x1xf32>, vector<64x1xf32> -> vector<64x1xf32>
    %c0_16 = arith.constant 0 : index
    %20 = memref.load %arg5[%c0_16] : memref<3xf32, #tpu.memory_space<smem>>
    %21 = vector.broadcast %20 : f32 to vector<64x1xf32>
    %22 = arith.addf %19, %21 : vector<64x1xf32>
    %c1_17 = arith.constant 1 : index
    %c0_18 = arith.constant 0 : index
    %c0_19 = arith.constant 0 : index
    %23 = vector.load %arg2[%c1_17, %c0_18, %c0_19] : memref<3x32x32xf32, #tpu.memory_space<vmem>>, vector<1x32x32xf32>
    %24 = vector.shape_cast %23 : vector<1x32x32xf32> to vector<32x32xf32>
    %cst_20 = arith.constant dense<0.000000e+00> : vector<64x32xf32>
    %25 = tpu.matmul %5, %24, %cst_20 {dimension_numbers = #tpu.dot_dimension_numbers<[1], [0], [0], [1], [0, 0, 1, 1], [], []>} : vector<64x32xf32>, vector<32x32xf32>, vector<64x32xf32> -> vector<64x32xf32>
    %c1_21 = arith.constant 1 : index
    %c0_22 = arith.constant 0 : index
    %c0_23 = arith.constant 0 : index
    %26 = vector.load %arg3[%c1_21, %c0_22, %c0_23] : memref<3x1x32xf32, #tpu.memory_space<vmem>>, vector<1x1x32xf32>
    %27 = vector.shape_cast %26 : vector<1x1x32xf32> to vector<1x32xf32>
    %28 = vector.broadcast %27 : vector<1x32xf32> to vector<64x32xf32>
    %29 = arith.addf %25, %28 : vector<64x32xf32>
    %30 = math.tanh %29 : vector<64x32xf32>
    %c1_24 = arith.constant 1 : index
    %c0_25 = arith.constant 0 : index
    %c0_26 = arith.constant 0 : index
    %31 = vector.load %arg4[%c1_24, %c0_25, %c0_26] : memref<3x32x1xf32, #tpu.memory_space<vmem>>, vector<1x32x1xf32>
    %32 = vector.shape_cast %31 : vector<1x32x1xf32> to vector<32x1xf32>
    %cst_27 = arith.constant dense<0.000000e+00> : vector<64x1xf32>
    %33 = tpu.matmul %30, %32, %cst_27 {dimension_numbers = #tpu.dot_dimension_numbers<[1], [0], [0], [1], [0, 0, 1, 1], [], []>} : vector<64x32xf32>, vector<32x1xf32>, vector<64x1xf32> -> vector<64x1xf32>
    %c1_28 = arith.constant 1 : index
    %34 = memref.load %arg5[%c1_28] : memref<3xf32, #tpu.memory_space<smem>>
    %35 = vector.broadcast %34 : f32 to vector<64x1xf32>
    %36 = arith.addf %33, %35 : vector<64x1xf32>
    %c2_29 = arith.constant 2 : index
    %c0_30 = arith.constant 0 : index
    %c0_31 = arith.constant 0 : index
    %37 = vector.load %arg2[%c2_29, %c0_30, %c0_31] : memref<3x32x32xf32, #tpu.memory_space<vmem>>, vector<1x32x32xf32>
    %38 = vector.shape_cast %37 : vector<1x32x32xf32> to vector<32x32xf32>
    %cst_32 = arith.constant dense<0.000000e+00> : vector<64x32xf32>
    %39 = tpu.matmul %8, %38, %cst_32 {dimension_numbers = #tpu.dot_dimension_numbers<[1], [0], [0], [1], [0, 0, 1, 1], [], []>} : vector<64x32xf32>, vector<32x32xf32>, vector<64x32xf32> -> vector<64x32xf32>
    %c2_33 = arith.constant 2 : index
    %c0_34 = arith.constant 0 : index
    %c0_35 = arith.constant 0 : index
    %40 = vector.load %arg3[%c2_33, %c0_34, %c0_35] : memref<3x1x32xf32, #tpu.memory_space<vmem>>, vector<1x1x32xf32>
    %41 = vector.shape_cast %40 : vector<1x1x32xf32> to vector<1x32xf32>
    %42 = vector.broadcast %41 : vector<1x32xf32> to vector<64x32xf32>
    %43 = arith.addf %39, %42 : vector<64x32xf32>
    %44 = math.tanh %43 : vector<64x32xf32>
    %c2_36 = arith.constant 2 : index
    %c0_37 = arith.constant 0 : index
    %c0_38 = arith.constant 0 : index
    %45 = vector.load %arg4[%c2_36, %c0_37, %c0_38] : memref<3x32x1xf32, #tpu.memory_space<vmem>>, vector<1x32x1xf32>
    %46 = vector.shape_cast %45 : vector<1x32x1xf32> to vector<32x1xf32>
    %cst_39 = arith.constant dense<0.000000e+00> : vector<64x1xf32>
    %47 = tpu.matmul %44, %46, %cst_39 {dimension_numbers = #tpu.dot_dimension_numbers<[1], [0], [0], [1], [0, 0, 1, 1], [], []>} : vector<64x32xf32>, vector<32x1xf32>, vector<64x1xf32> -> vector<64x1xf32>
    %c2_40 = arith.constant 2 : index
    %48 = memref.load %arg5[%c2_40] : memref<3xf32, #tpu.memory_space<smem>>
    %49 = vector.broadcast %48 : f32 to vector<64x1xf32>
    %50 = arith.addf %47, %49 : vector<64x1xf32>
    %51 = arith.maximumf %22, %36 : vector<64x1xf32>
    %52 = arith.maximumf %51, %50 : vector<64x1xf32>
    %53 = arith.subf %22, %52 : vector<64x1xf32>
    %54 = math.exp %53 : vector<64x1xf32>
    %55 = arith.subf %36, %52 : vector<64x1xf32>
    %56 = math.exp %55 : vector<64x1xf32>
    %57 = arith.subf %50, %52 : vector<64x1xf32>
    %58 = math.exp %57 : vector<64x1xf32>
    %59 = arith.addf %54, %56 : vector<64x1xf32>
    %60 = arith.addf %59, %58 : vector<64x1xf32>
    %61 = tpu.reciprocal %60 : vector<64x1xf32> -> vector<64x1xf32>
    %62 = arith.mulf %54, %61 : vector<64x1xf32>
    %63 = vector.broadcast %62 : vector<64x1xf32> to vector<64x32xf32>
    %64 = arith.mulf %2, %63 : vector<64x32xf32>
    %65 = arith.mulf %56, %61 : vector<64x1xf32>
    %66 = vector.broadcast %65 : vector<64x1xf32> to vector<64x32xf32>
    %67 = arith.mulf %5, %66 : vector<64x32xf32>
    %68 = arith.addf %64, %67 : vector<64x32xf32>
    %69 = arith.mulf %58, %61 : vector<64x1xf32>
    %70 = vector.broadcast %69 : vector<64x1xf32> to vector<64x32xf32>
    %71 = arith.mulf %8, %70 : vector<64x32xf32>
    %72 = arith.addf %68, %71 : vector<64x32xf32>
    %c0_41 = arith.constant 0 : index
    %c0_42 = arith.constant 0 : index
    %73 = vector.load %arg6[%c0_41, %c0_42] : memref<32x32xf32, #tpu.memory_space<vmem>>, vector<32x32xf32>
    %cst_43 = arith.constant dense<0.000000e+00> : vector<64x32xf32>
    %74 = tpu.matmul %72, %73, %cst_43 {dimension_numbers = #tpu.dot_dimension_numbers<[1], [0], [0], [1], [0, 0, 1, 1], [], []>} : vector<64x32xf32>, vector<32x32xf32>, vector<64x32xf32> -> vector<64x32xf32>
    %c0_44 = arith.constant 0 : index
    %c0_45 = arith.constant 0 : index
    %75 = vector.load %arg7[%c0_44, %c0_45] : memref<1x32xf32, #tpu.memory_space<vmem>>, vector<1x32xf32>
    %76 = vector.broadcast %75 : vector<1x32xf32> to vector<64x32xf32>
    %77 = arith.addf %74, %76 : vector<64x32xf32>
    %cst_46 = arith.constant dense<0.000000e+00> : vector<64xf32>
    %78 = vector.multi_reduction <add>, %77, %cst_46 [1] : vector<64x32xf32> to vector<64xf32>
    %79 = vector.shape_cast %78 : vector<64xf32> to vector<64x1xf32>
    %cst_47 = arith.constant 3.200000e+01 : f32
    %80 = vector.broadcast %cst_47 : f32 to vector<64x1xf32>
    %81 = arith.divf %79, %80 : vector<64x1xf32>
    %82 = arith.mulf %77, %77 : vector<64x32xf32>
    %cst_48 = arith.constant dense<0.000000e+00> : vector<64xf32>
    %83 = vector.multi_reduction <add>, %82, %cst_48 [1] : vector<64x32xf32> to vector<64xf32>
    %84 = vector.shape_cast %83 : vector<64xf32> to vector<64x1xf32>
    %cst_49 = arith.constant 3.200000e+01 : f32
    %85 = vector.broadcast %cst_49 : f32 to vector<64x1xf32>
    %86 = arith.divf %84, %85 : vector<64x1xf32>
    %87 = vector.broadcast %81 : vector<64x1xf32> to vector<64x32xf32>
    %88 = arith.subf %77, %87 : vector<64x32xf32>
    %89 = arith.mulf %81, %81 : vector<64x1xf32>
    %90 = arith.subf %86, %89 : vector<64x1xf32>
    %cst_50 = arith.constant 9.99999974E-6 : f32
    %91 = vector.broadcast %cst_50 : f32 to vector<64x1xf32>
    %92 = arith.addf %90, %91 : vector<64x1xf32>
    %93 = math.rsqrt %92 : vector<64x1xf32>
    %94 = vector.broadcast %93 : vector<64x1xf32> to vector<64x32xf32>
    %95 = arith.mulf %88, %94 : vector<64x32xf32>
    %c0_51 = arith.constant 0 : index
    %c0_52 = arith.constant 0 : index
    %96 = vector.load %arg8[%c0_51, %c0_52] : memref<1x32xf32, #tpu.memory_space<vmem>>, vector<1x32xf32>
    %97 = vector.broadcast %96 : vector<1x32xf32> to vector<64x32xf32>
    %98 = arith.mulf %95, %97 : vector<64x32xf32>
    %c0_53 = arith.constant 0 : index
    %c0_54 = arith.constant 0 : index
    %99 = vector.load %arg9[%c0_53, %c0_54] : memref<1x32xf32, #tpu.memory_space<vmem>>, vector<1x32xf32>
    %100 = vector.broadcast %99 : vector<1x32xf32> to vector<64x32xf32>
    %101 = arith.addf %98, %100 : vector<64x32xf32>
    %cst_55 = arith.constant 0.000000e+00 : f32
    %102 = vector.broadcast %cst_55 : f32 to vector<64x32xf32>
    %103 = arith.maximumf %101, %102 : vector<64x32xf32>
    %c0_56 = arith.constant 0 : index
    %c0_57 = arith.constant 0 : index
    %104 = vector.load %arg10[%c0_56, %c0_57] : memref<64x32xf32, #tpu.memory_space<vmem>>, vector<64x32xf32>
    tpu.vector_store %arg10[%c0_56, %c0_57], %103 {strides = array<i32>} : memref<64x32xf32, #tpu.memory_space<vmem>>, vector<64x32xf32>,
    return
  }
  func.func @transform_0(%arg0: i32) -> (i32, i32, i32) {
    %c0_i32 = arith.constant 0 : i32
    %c0_i32_0 = arith.constant 0 : i32
    %c0_i32_1 = arith.constant 0 : i32
    return %c0_i32, %arg0, %c0_i32_0 : i32, i32, i32
  }
  func.func @transform_1(%arg0: i32) -> (i32, i32, i32) {
    %c0_i32 = arith.constant 0 : i32
    %c0_i32_0 = arith.constant 0 : i32
    %c0_i32_1 = arith.constant 0 : i32
    %c0_i32_2 = arith.constant 0 : i32
    return %c0_i32, %c0_i32_0, %c0_i32_1 : i32, i32, i32
  }
  func.func @transform_2(%arg0: i32) -> (i32, i32, i32) {
    %c0_i32 = arith.constant 0 : i32
    %c0_i32_0 = arith.constant 0 : i32
    %c0_i32_1 = arith.constant 0 : i32
    %c0_i32_2 = arith.constant 0 : i32
    return %c0_i32, %c0_i32_0, %c0_i32_1 : i32, i32, i32
  }
  func.func @transform_3(%arg0: i32) -> (i32, i32, i32) {
    %c0_i32 = arith.constant 0 : i32
    %c0_i32_0 = arith.constant 0 : i32
    %c0_i32_1 = arith.constant 0 : i32
    %c0_i32_2 = arith.constant 0 : i32
    return %c0_i32, %c0_i32_0, %c0_i32_1 : i32, i32, i32
  }
  func.func @transform_4(%arg0: i32) -> i32 {
    %c0_i32 = arith.constant 0 : i32
    %c0_i32_0 = arith.constant 0 : i32
    return %c0_i32 : i32
  }
  func.func @transform_5(%arg0: i32) -> (i32, i32) {
    %c0_i32 = arith.constant 0 : i32
    %c0_i32_0 = arith.constant 0 : i32
    %c0_i32_1 = arith.constant 0 : i32
    return %c0_i32, %c0_i32_0 : i32, i32
  }
  func.func @transform_6(%arg0: i32) -> (i32, i32) {
    %c0_i32 = arith.constant 0 : i32
    %c0_i32_0 = arith.constant 0 : i32
    %c0_i32_1 = arith.constant 0 : i32
    return %c0_i32, %c0_i32_0 : i32, i32
  }
  func.func @transform_7(%arg0: i32) -> (i32, i32) {
    %c0_i32 = arith.constant 0 : i32
    %c0_i32_0 = arith.constant 0 : i32
    %c0_i32_1 = arith.constant 0 : i32
    return %c0_i32, %c0_i32_0 : i32, i32
  }
  func.func @transform_8(%arg0: i32) -> (i32, i32) {
    %c0_i32 = arith.constant 0 : i32
    %c0_i32_0 = arith.constant 0 : i32
    %c0_i32_1 = arith.constant 0 : i32
    return %c0_i32, %c0_i32_0 : i32, i32
  }
  func.func @transform_9(%arg0: i32) -> (i32, i32) {
    %c0_i32 = arith.constant 0 : i32
    %c0_i32_0 = arith.constant 0 : i32
    return %arg0, %c0_i32 : i32, i32
  }
}

</mosaic_0001>

<llo_original>
// kernel: tpu_custom_call.1
$region0: #{tpu_custom_call.1}
  #allocation0 [shape = 'u32[]', space=smem, size = 0x4, offset = 0x4, fixed_abs, tag = 'smem constant byte address 0x4 - core index']
  #allocation1 [shape = 'u32[72,128]{1,0:T(1,128)}', space=vmem, size = 0x9000, scoped, tag = 'internal scratch']
  %s0 = inlined_call_operand.vmem [shape: bf16[3,64,32], index: 0, kind: input, shape index: {}]
  %s1 = inlined_call_operand.vmem [shape: f32[3,32,32], index: 1, kind: input, shape index: {}]
  %s2 = inlined_call_operand.vmem [shape: f32[3,1,32], index: 2, kind: input, shape index: {}]
  %s3 = inlined_call_operand.vmem [shape: f32[3,32,1], index: 3, kind: input, shape index: {}]
  %s4 = inlined_call_operand.vmem [shape: f32[3], index: 4, kind: input, shape index: {}]
  %s5 = inlined_call_operand.vmem [shape: f32[32,32], index: 5, kind: input, shape index: {}]
  %s6 = inlined_call_operand.vmem [shape: f32[1,32], index: 6, kind: input, shape index: {}]
  %s7 = inlined_call_operand.vmem [shape: f32[1,32], index: 7, kind: input, shape index: {}]
  %s8 = inlined_call_operand.vmem [shape: f32[1,32], index: 8, kind: input, shape index: {}]
  %s9 = inlined_call_operand.vmem [shape: f32[64,32], index: 9, kind: output, shape index: {}]
  %s10 = sld [smem:[#allocation0]]
  $region50: #{tpu_custom_call.1} parent=0
    _
  %s12 = ssub.s32 1, %s10
  %s13 = scalar_select 0, %s12, %s10
  $region1: #{tpu_custom_call.1} parent=0
    #allocation2 [shape = 'u8[512]{0}', space=smem, size = 0x200, scoped, tag = 'input window, operand 4, single buffered']
    #allocation3 [shape = 's32[1]{0}', space=sflag, size = 0x4, scoped, tag = 'scoped memory for tpu_custom_call.1']
    %14 = vsyncpa [#allocation3], 0
    // Predicated region
    $region2: #{tpu_custom_call.1} parent=1 // pred_check
      _
    $region3: #{tpu_custom_call.1} parent=1 // pred_check_branch
      %16 = sbr.rel (0) target = $region5
    $region4: #{tpu_custom_call.1} parent=1 // pred_region
      _
    $region5: #{tpu_custom_call.1} parent=1 // pred_fallthru
      _
    // Predicated region
    $region6: #{tpu_custom_call.1} parent=1 // pred_check
      _
    $region7: #{tpu_custom_call.1} parent=1 // pred_check_branch
      %18 = sbr.rel (0) target = $region9
    $region8: #{tpu_custom_call.1} parent=1 // pred_region
      _
    $region9: #{tpu_custom_call.1} parent=1 // pred_fallthru
      _
    // Predicated region
    $region10: #{tpu_custom_call.1} parent=1 // pred_check
      _
    $region11: #{tpu_custom_call.1} parent=1 // pred_check_branch
      %20 = sbr.rel (0) target = $region13
    $region12: #{tpu_custom_call.1} parent=1 // pred_region
      _
    $region13: #{tpu_custom_call.1} parent=1 // pred_fallthru
      _
    // Predicated region
    $region14: #{tpu_custom_call.1} parent=1 // pred_check
      _
    $region15: #{tpu_custom_call.1} parent=1 // pred_check_branch
      %22 = sbr.rel (0) target = $region17
    $region16: #{tpu_custom_call.1} parent=1 // pred_region
      _
    $region17: #{tpu_custom_call.1} parent=1 // pred_fallthru
      _
    // Predicated region
    $region18: #{tpu_custom_call.1} parent=1 // pred_check
      _
    $region19: #{tpu_custom_call.1} parent=1 // pred_check_branch
      %24 = sbr.rel (0) target = $region21
    $region20: #{tpu_custom_call.1} parent=1 // pred_region
      %26 = vsyncadd [#allocation3], 0
      %s28 = sshll.u32 %s4, 4
      %s29 = int_to_ptr.vmem [resolvable:$true] %s28
      %31 = dma.vmem_to_smem %s29, 16, [#allocation2], [#allocation3]
    $region21: #{tpu_custom_call.1} parent=1 // pred_fallthru
      _
    // Predicated region
    $region22: #{tpu_custom_call.1} parent=1 // pred_check
      _
    $region23: #{tpu_custom_call.1} parent=1 // pred_check_branch
      %33 = sbr.rel (0) target = $region25
    $region24: #{tpu_custom_call.1} parent=1 // pred_region
      _
    $region25: #{tpu_custom_call.1} parent=1 // pred_fallthru
      _
    // Predicated region
    $region26: #{tpu_custom_call.1} parent=1 // pred_check
      _
    $region27: #{tpu_custom_call.1} parent=1 // pred_check_branch
      %35 = sbr.rel (0) target = $region29
    $region28: #{tpu_custom_call.1} parent=1 // pred_region
      _
    $region29: #{tpu_custom_call.1} parent=1 // pred_fallthru
      _
    // Predicated region
    $region30: #{tpu_custom_call.1} parent=1 // pred_check
      _
    $region31: #{tpu_custom_call.1} parent=1 // pred_check_branch
      %37 = sbr.rel (0) target = $region33
    $region32: #{tpu_custom_call.1} parent=1 // pred_region
      _
    $region33: #{tpu_custom_call.1} parent=1 // pred_fallthru
      _
    // Predicated region
    $region34: #{tpu_custom_call.1} parent=1 // pred_check
      _
    $region35: #{tpu_custom_call.1} parent=1 // pred_check_branch
      %39 = sbr.rel (0) target = $region37
    $region36: #{tpu_custom_call.1} parent=1 // pred_region
      _
    $region37: #{tpu_custom_call.1} parent=1 // pred_fallthru
      _
    // Predicated region
    $region38: #{tpu_custom_call.1} parent=1 // pred_check
      _
    $region39: #{tpu_custom_call.1} parent=1 // pred_check_branch
      %41 = sbr.rel (0) target = $region41
    $region40: #{tpu_custom_call.1} parent=1 // pred_region
      %43 = dma.done [#allocation3], 16
    $region41: #{tpu_custom_call.1} parent=1 // pred_fallthru
      _
    %44 = sfence
    %v45 = vld [vmem:[%s0] sm:$0xf]
    %v46 = vld [vmem:[%s0 + $0x4] sm:$0xf]
    %v47 = vld [vmem:[%s0 + $0x8] sm:$0xf]
    %v48 = vld [vmem:[%s0 + $0xc] sm:$0xf]
    %v49 = vld [vmem:[%s0 + $0x10] sm:$0xf]
    %v50 = vld [vmem:[%s0 + $0x14] sm:$0xf]
    %v51 = vld [vmem:[%s0 + $0x18] sm:$0xf]
    %v52 = vld [vmem:[%s0 + $0x1c] sm:$0xf]
    %v53 = vunpack.c.l.bf16 %v45
    %v54 = vunpack.c.l.bf16 %v46
    %v55 = vunpack.c.l.bf16 %v47
    %v56 = vunpack.c.l.bf16 %v48
    %v57 = vunpack.c.l.bf16 %v49
    %v58 = vunpack.c.l.bf16 %v50
    %v59 = vunpack.c.l.bf16 %v51
    %v60 = vunpack.c.l.bf16 %v52
    %s61 = scalar_lea.vmem %s0, 32
    %v62 = vld [vmem:[%s61] sm:$0xf]
    %v63 = vld [vmem:[%s61 + $0x4] sm:$0xf]
    %v64 = vld [vmem:[%s61 + $0x8] sm:$0xf]
    %v65 = vld [vmem:[%s61 + $0xc] sm:$0xf]
    %v66 = vld [vmem:[%s61 + $0x10] sm:$0xf]
    %v67 = vld [vmem:[%s61 + $0x14] sm:$0xf]
    %v68 = vld [vmem:[%s61 + $0x18] sm:$0xf]
    %v69 = vld [vmem:[%s61 + $0x1c] sm:$0xf]
    %v70 = vunpack.c.l.bf16 %v62
    %v71 = vunpack.c.l.bf16 %v63
    %v72 = vunpack.c.l.bf16 %v64
    %v73 = vunpack.c.l.bf16 %v65
    %v74 = vunpack.c.l.bf16 %v66
    %v75 = vunpack.c.l.bf16 %v67
    %v76 = vunpack.c.l.bf16 %v68
    %v77 = vunpack.c.l.bf16 %v69
    %s78 = scalar_lea.vmem %s0, 64
    %v79 = vld [vmem:[%s78] sm:$0xf]
    %v80 = vld [vmem:[%s78 + $0x4] sm:$0xf]
    %v81 = vld [vmem:[%s78 + $0x8] sm:$0xf]
    %v82 = vld [vmem:[%s78 + $0xc] sm:$0xf]
    %v83 = vld [vmem:[%s78 + $0x10] sm:$0xf]
    %v84 = vld [vmem:[%s78 + $0x14] sm:$0xf]
    %v85 = vld [vmem:[%s78 + $0x18] sm:$0xf]
    %v86 = vld [vmem:[%s78 + $0x1c] sm:$0xf]
    %v87 = vunpack.c.l.bf16 %v79
    %v88 = vunpack.c.l.bf16 %v80
    %v89 = vunpack.c.l.bf16 %v81
    %v90 = vunpack.c.l.bf16 %v82
    %v91 = vunpack.c.l.bf16 %v83
    %v92 = vunpack.c.l.bf16 %v84
    %v93 = vunpack.c.l.bf16 %v85
    %v94 = vunpack.c.l.bf16 %v86
    %v95 = vld [vmem:[%s1] sm:$0xff]
    %v96 = vld [vmem:[%s1 + $0x8] sm:$0xff]
    %v97 = vld [vmem:[%s1 + $0x10] sm:$0xff]
    %v98 = vld [vmem:[%s1 + $0x18] sm:$0xff]
    %v99 = vld [vmem:[%s2] sm:$0x1]
    %v101 = vperm.slane %v99, 0
    %vm103 = vcmask 261120
    %v105 = vsel %vm103, %v53, 0
    %v108 = vsel %vm103, %v54, 0
    %v111 = vsel %vm103, %v55, 0
    %v114 = vsel %vm103, %v56, 0
    %v117 = vsel %vm103, %v57, 0
    %v120 = vsel %vm103, %v58, 0
    %v123 = vsel %vm103, %v59, 0
    %v126 = vsel %vm103, %v60, 0
    %128 = vmatpush.msra.mxu0 0.0
    %129 = vmatpush.msra.mxu0 0.0
    %130 = vmatpush.msra.mxu0 0.0
    %131 = vmatpush.msra.mxu0 0.0
    %132 = vmatpush.msra.mxu0 0.0
    %133 = vmatpush.msra.mxu0 0.0
    %134 = vmatpush.msra.mxu0 0.0
    %135 = vmatpush.msra.mxu0 0.0
    %136 = vmatpush.msra.mxu0 0.0
    %137 = vmatpush.msra.mxu0 0.0
    %138 = vmatpush.msra.mxu0 0.0
    %139 = vmatpush.msra.mxu0 0.0
    %140 = vmatpush.msra.mxu0 %v98
    %141 = vmatpush.msra.mxu0 %v97
    %142 = vmatpush.msra.mxu0 %v96
    %143 = vmatpush.msra.mxu0 %v95
    %144 = vmatmul.f32.gmra.mxu0 %v105
    %v145 = vpop.f32.mrf.mxu0
    %v146 = vadd.f32 %v101, %v145
    %147 = vmatmul.f32.gmra.mxu0 %v108
    %v148 = vpop.f32.mrf.mxu0
    %v149 = vadd.f32 %v101, %v148
    %150 = vmatmul.f32.gmra.mxu0 %v111
    %v151 = vpop.f32.mrf.mxu0
    %v152 = vadd.f32 %v101, %v151
    %153 = vmatmul.f32.gmra.mxu0 %v114
    %v154 = vpop.f32.mrf.mxu0
    %v155 = vadd.f32 %v101, %v154
    %156 = vmatmul.f32.gmra.mxu0 %v117
    %v157 = vpop.f32.mrf.mxu0
    %v158 = vadd.f32 %v101, %v157
    %159 = vmatmul.f32.gmra.mxu0 %v120
    %v160 = vpop.f32.mrf.mxu0
    %v161 = vadd.f32 %v101, %v160
    %162 = vmatmul.f32.gmra.mxu0 %v123
    %v163 = vpop.f32.mrf.mxu0
    %v164 = vadd.f32 %v101, %v163
    %165 = vmatmul.f32.gmra.mxu0 %v126
    %v166 = vpop.f32.mrf.mxu0
    %v167 = vadd.f32 %v101, %v166
    %168 = vdwg.mxu0
    %v169 = vtanh.pop %v146
    %v170 = vtanh.pop %v149
    %v171 = vtanh.pop %v152
    %v172 = vtanh.pop %v155
    %v173 = vtanh.pop %v158
    %v174 = vtanh.pop %v161
    %v175 = vtanh.pop %v164
    %v176 = vtanh.pop %v167
    %v177 = vld [vmem:[%s3] sm:$0xff]
    %v178 = vld [vmem:[%s3 + $0x8] sm:$0xff]
    %v179 = vld [vmem:[%s3 + $0x10] sm:$0xff]
    %v180 = vld [vmem:[%s3 + $0x18] sm:$0xff]
    %s181 = sld [smem:[#allocation2]]
    %v182 = vstv %s181
    %v184 = vsel %vm103, %v169, 0
    %v187 = vsel %vm103, %v170, 0
    %v190 = vsel %vm103, %v171, 0
    %v193 = vsel %vm103, %v172, 0
    %v196 = vsel %vm103, %v173, 0
    %v199 = vsel %vm103, %v174, 0
    %v202 = vsel %vm103, %v175, 0
    %v205 = vsel %vm103, %v176, 0
    %207 = vmatpush.msra.mxu0 0.0
    %208 = vmatpush.msra.mxu0 0.0
    %209 = vmatpush.msra.mxu0 0.0
    %210 = vmatpush.msra.mxu0 0.0
    %211 = vmatpush.msra.mxu0 0.0
    %212 = vmatpush.msra.mxu0 0.0
    %213 = vmatpush.msra.mxu0 0.0
    %214 = vmatpush.msra.mxu0 0.0
    %215 = vmatpush.msra.mxu0 0.0
    %216 = vmatpush.msra.mxu0 0.0
    %217 = vmatpush.msra.mxu0 0.0
    %218 = vmatpush.msra.mxu0 0.0
    %219 = vmatpush.msra.mxu0 %v180
    %220 = vmatpush.msra.mxu0 %v179
    %221 = vmatpush.msra.mxu0 %v178
    %222 = vmatpush.msra.mxu0 %v177
    %223 = vmatmul.f32.gmra.mxu0 %v184
    %v224 = vpop.f32.mrf.mxu0
    %v225 = vadd.f32 %v182, %v224
    %226 = vmatmul.f32.gmra.mxu0 %v187
    %v227 = vpop.f32.mrf.mxu0
    %v228 = vadd.f32 %v182, %v227
    %229 = vmatmul.f32.gmra.mxu0 %v190
    %v230 = vpop.f32.mrf.mxu0
    %v231 = vadd.f32 %v182, %v230
    %232 = vmatmul.f32.gmra.mxu0 %v193
    %v233 = vpop.f32.mrf.mxu0
    %v234 = vadd.f32 %v182, %v233
    %235 = vmatmul.f32.gmra.mxu0 %v196
    %v236 = vpop.f32.mrf.mxu0
    %v237 = vadd.f32 %v182, %v236
    %238 = vmatmul.f32.gmra.mxu0 %v199
    %v239 = vpop.f32.mrf.mxu0
    %v240 = vadd.f32 %v182, %v239
    %241 = vmatmul.f32.gmra.mxu0 %v202
    %v242 = vpop.f32.mrf.mxu0
    %v243 = vadd.f32 %v182, %v242
    %244 = vmatmul.f32.gmra.mxu0 %v205
    %v245 = vpop.f32.mrf.mxu0
    %v246 = vadd.f32 %v182, %v245
    %247 = vdwg.mxu0
    %s248 = scalar_lea.vmem %s1, 32
    %v249 = vld [vmem:[%s248] sm:$0xff]
    %v250 = vld [vmem:[%s248 + $0x8] sm:$0xff]
    %v251 = vld [vmem:[%s248 + $0x10] sm:$0xff]
    %v252 = vld [vmem:[%s248 + $0x18] sm:$0xff]
    %s253 = scalar_lea.vmem %s2, 1
    %v254 = vld [vmem:[%s253] sm:$0x1]
    %v256 = vperm.slane %v254, 0
    %v259 = vsel %vm103, %v70, 0
    %v262 = vsel %vm103, %v71, 0
    %v265 = vsel %vm103, %v72, 0
    %v268 = vsel %vm103, %v73, 0
    %v271 = vsel %vm103, %v74, 0
    %v274 = vsel %vm103, %v75, 0
    %v277 = vsel %vm103, %v76, 0
    %v280 = vsel %vm103, %v77, 0
    %282 = vmatpush.msra.mxu0 0.0
    %283 = vmatpush.msra.mxu0 0.0
    %284 = vmatpush.msra.mxu0 0.0
    %285 = vmatpush.msra.mxu0 0.0
    %286 = vmatpush.msra.mxu0 0.0
    %287 = vmatpush.msra.mxu0 0.0
    %288 = vmatpush.msra.mxu0 0.0
    %289 = vmatpush.msra.mxu0 0.0
    %290 = vmatpush.msra.mxu0 0.0
    %291 = vmatpush.msra.mxu0 0.0
    %292 = vmatpush.msra.mxu0 0.0
    %293 = vmatpush.msra.mxu0 0.0
    %294 = vmatpush.msra.mxu0 %v252
    %295 = vmatpush.msra.mxu0 %v251
    %296 = vmatpush.msra.mxu0 %v250
    %297 = vmatpush.msra.mxu0 %v249
    %298 = vmatmul.f32.gmra.mxu0 %v259
    %v299 = vpop.f32.mrf.mxu0
    %v300 = vadd.f32 %v256, %v299
    %301 = vmatmul.f32.gmra.mxu0 %v262
    %v302 = vpop.f32.mrf.mxu0
    %v303 = vadd.f32 %v256, %v302
    %304 = vmatmul.f32.gmra.mxu0 %v265
    %v305 = vpop.f32.mrf.mxu0
    %v306 = vadd.f32 %v256, %v305
    %307 = vmatmul.f32.gmra.mxu0 %v268
    %v308 = vpop.f32.mrf.mxu0
    %v309 = vadd.f32 %v256, %v308
    %310 = vmatmul.f32.gmra.mxu0 %v271
    %v311 = vpop.f32.mrf.mxu0
    %v312 = vadd.f32 %v256, %v311
    %313 = vmatmul.f32.gmra.mxu0 %v274
    %v314 = vpop.f32.mrf.mxu0
    %v315 = vadd.f32 %v256, %v314
    %316 = vmatmul.f32.gmra.mxu0 %v277
    %v317 = vpop.f32.mrf.mxu0
    %v318 = vadd.f32 %v256, %v317
    %319 = vmatmul.f32.gmra.mxu0 %v280
    %v320 = vpop.f32.mrf.mxu0
    %v321 = vadd.f32 %v256, %v320
    %322 = vdwg.mxu0
    %v323 = vtanh.pop %v300
    %v324 = vtanh.pop %v303
    %v325 = vtanh.pop %v306
    %v326 = vtanh.pop %v309
    %v327 = vtanh.pop %v312
    %v328 = vtanh.pop %v315
    %v329 = vtanh.pop %v318
    %v330 = vtanh.pop %v321
    %s331 = scalar_lea.vmem %s3, 32
    %v332 = vld [vmem:[%s331] sm:$0xff]
    %v333 = vld [vmem:[%s331 + $0x8] sm:$0xff]
    %v334 = vld [vmem:[%s331 + $0x10] sm:$0xff]
    %v335 = vld [vmem:[%s331 + $0x18] sm:$0xff]
    %s336 = sld [smem:[#allocation2 + $0x1]]
    %v337 = vstv %s336
    %v339 = vsel %vm103, %v323, 0
    %v342 = vsel %vm103, %v324, 0
    %v345 = vsel %vm103, %v325, 0
    %v348 = vsel %vm103, %v326, 0
    %v351 = vsel %vm103, %v327, 0
    %v354 = vsel %vm103, %v328, 0
    %v357 = vsel %vm103, %v329, 0
    %v360 = vsel %vm103, %v330, 0
    %362 = vmatpush.msra.mxu0 0.0
    %363 = vmatpush.msra.mxu0 0.0
    %364 = vmatpush.msra.mxu0 0.0
    %365 = vmatpush.msra.mxu0 0.0
    %366 = vmatpush.msra.mxu0 0.0
    %367 = vmatpush.msra.mxu0 0.0
    %368 = vmatpush.msra.mxu0 0.0
    %369 = vmatpush.msra.mxu0 0.0
    %370 = vmatpush.msra.mxu0 0.0
    %371 = vmatpush.msra.mxu0 0.0
    %372 = vmatpush.msra.mxu0 0.0
    %373 = vmatpush.msra.mxu0 0.0
    %374 = vmatpush.msra.mxu0 %v335
    %375 = vmatpush.msra.mxu0 %v334
    %376 = vmatpush.msra.mxu0 %v333
    %377 = vmatpush.msra.mxu0 %v332
    %378 = vmatmul.f32.gmra.mxu0 %v339
    %v379 = vpop.f32.mrf.mxu0
    %v380 = vadd.f32 %v337, %v379
    %381 = vmatmul.f32.gmra.mxu0 %v342
    %v382 = vpop.f32.mrf.mxu0
    %v383 = vadd.f32 %v337, %v382
    %384 = vmatmul.f32.gmra.mxu0 %v345
    %v385 = vpop.f32.mrf.mxu0
    %v386 = vadd.f32 %v337, %v385
    %387 = vmatmul.f32.gmra.mxu0 %v348
    %v388 = vpop.f32.mrf.mxu0
    %v389 = vadd.f32 %v337, %v388
    %390 = vmatmul.f32.gmra.mxu0 %v351
    %v391 = vpop.f32.mrf.mxu0
    %v392 = vadd.f32 %v337, %v391
    %393 = vmatmul.f32.gmra.mxu0 %v354
    %v394 = vpop.f32.mrf.mxu0
    %v395 = vadd.f32 %v337, %v394
    %396 = vmatmul.f32.gmra.mxu0 %v357
    %v397 = vpop.f32.mrf.mxu0
    %v398 = vadd.f32 %v337, %v397
    %399 = vmatmul.f32.gmra.mxu0 %v360
    %v400 = vpop.f32.mrf.mxu0
    %v401 = vadd.f32 %v337, %v400
    %402 = vdwg.mxu0
    %s403 = scalar_lea.vmem %s1, 64
    %v404 = vld [vmem:[%s403] sm:$0xff]
    %v405 = vld [vmem:[%s403 + $0x8] sm:$0xff]
    %v406 = vld [vmem:[%s403 + $0x10] sm:$0xff]
    %v407 = vld [vmem:[%s403 + $0x18] sm:$0xff]
    %s408 = scalar_lea.vmem %s2, 2
    %v409 = vld [vmem:[%s408] sm:$0x1]
    %v411 = vperm.slane %v409, 0
    %v414 = vsel %vm103, %v87, 0
    %v417 = vsel %vm103, %v88, 0
    %v420 = vsel %vm103, %v89, 0
    %v423 = vsel %vm103, %v90, 0
    %v426 = vsel %vm103, %v91, 0
    %v429 = vsel %vm103, %v92, 0
    %v432 = vsel %vm103, %v93, 0
    %v435 = vsel %vm103, %v94, 0
    %437 = vmatpush.msra.mxu0 0.0
    %438 = vmatpush.msra.mxu0 0.0
    %439 = vmatpush.msra.mxu0 0.0
    %440 = vmatpush.msra.mxu0 0.0
    %441 = vmatpush.msra.mxu0 0.0
    %442 = vmatpush.msra.mxu0 0.0
    %443 = vmatpush.msra.mxu0 0.0
    %444 = vmatpush.msra.mxu0 0.0
    %445 = vmatpush.msra.mxu0 0.0
    %446 = vmatpush.msra.mxu0 0.0
    %447 = vmatpush.msra.mxu0 0.0
    %448 = vmatpush.msra.mxu0 0.0
    %449 = vmatpush.msra.mxu0 %v407
    %450 = vmatpush.msra.mxu0 %v406
    %451 = vmatpush.msra.mxu0 %v405
    %452 = vmatpush.msra.mxu0 %v404
    %453 = vmatmul.f32.gmra.mxu0 %v414
    %v454 = vpop.f32.mrf.mxu0
    %v455 = vadd.f32 %v411, %v454
    %456 = vmatmul.f32.gmra.mxu0 %v417
    %v457 = vpop.f32.mrf.mxu0
    %v458 = vadd.f32 %v411, %v457
    %459 = vmatmul.f32.gmra.mxu0 %v420
    %v460 = vpop.f32.mrf.mxu0
    %v461 = vadd.f32 %v411, %v460
    %462 = vmatmul.f32.gmra.mxu0 %v423
    %v463 = vpop.f32.mrf.mxu0
    %v464 = vadd.f32 %v411, %v463
    %465 = vmatmul.f32.gmra.mxu0 %v426
    %v466 = vpop.f32.mrf.mxu0
    %v467 = vadd.f32 %v411, %v466
    %468 = vmatmul.f32.gmra.mxu0 %v429
    %v469 = vpop.f32.mrf.mxu0
    %v470 = vadd.f32 %v411, %v469
    %471 = vmatmul.f32.gmra.mxu0 %v432
    %v472 = vpop.f32.mrf.mxu0
    %v473 = vadd.f32 %v411, %v472
    %474 = vmatmul.f32.gmra.mxu0 %v435
    %v475 = vpop.f32.mrf.mxu0
    %v476 = vadd.f32 %v411, %v475
    %477 = vdwg.mxu0
    %v478 = vtanh.pop %v455
    %v479 = vtanh.pop %v458
    %v480 = vtanh.pop %v461
    %v481 = vtanh.pop %v464
    %v482 = vtanh.pop %v467
    %v483 = vtanh.pop %v470
    %v484 = vtanh.pop %v473
    %v485 = vtanh.pop %v476
    %s486 = scalar_lea.vmem %s3, 64
    %v487 = vld [vmem:[%s486] sm:$0xff]
    %v488 = vld [vmem:[%s486 + $0x8] sm:$0xff]
    %v489 = vld [vmem:[%s486 + $0x10] sm:$0xff]
    %v490 = vld [vmem:[%s486 + $0x18] sm:$0xff]
    %s491 = sld [smem:[#allocation2 + $0x2]]
    %v492 = vstv %s491
    %v494 = vsel %vm103, %v478, 0
    %v497 = vsel %vm103, %v479, 0
    %v500 = vsel %vm103, %v480, 0
    %v503 = vsel %vm103, %v481, 0
    %v506 = vsel %vm103, %v482, 0
    %v509 = vsel %vm103, %v483, 0
    %v512 = vsel %vm103, %v484, 0
    %v515 = vsel %vm103, %v485, 0
    %517 = vmatpush.msra.mxu0 0.0
    %518 = vmatpush.msra.mxu0 0.0
    %519 = vmatpush.msra.mxu0 0.0
    %520 = vmatpush.msra.mxu0 0.0
    %521 = vmatpush.msra.mxu0 0.0
    %522 = vmatpush.msra.mxu0 0.0
    %523 = vmatpush.msra.mxu0 0.0
    %524 = vmatpush.msra.mxu0 0.0
    %525 = vmatpush.msra.mxu0 0.0
    %526 = vmatpush.msra.mxu0 0.0
    %527 = vmatpush.msra.mxu0 0.0
    %528 = vmatpush.msra.mxu0 0.0
    %529 = vmatpush.msra.mxu0 %v490
    %530 = vmatpush.msra.mxu0 %v489
    %531 = vmatpush.msra.mxu0 %v488
    %532 = vmatpush.msra.mxu0 %v487
    %533 = vmatmul.f32.gmra.mxu0 %v494
    %v534 = vpop.f32.mrf.mxu0
    %v535 = vadd.f32 %v492, %v534
    %536 = vmatmul.f32.gmra.mxu0 %v497
    %v537 = vpop.f32.mrf.mxu0
    %v538 = vadd.f32 %v492, %v537
    %539 = vmatmul.f32.gmra.mxu0 %v500
    %v540 = vpop.f32.mrf.mxu0
    %v541 = vadd.f32 %v492, %v540
    %542 = vmatmul.f32.gmra.mxu0 %v503
    %v543 = vpop.f32.mrf.mxu0
    %v544 = vadd.f32 %v492, %v543
    %545 = vmatmul.f32.gmra.mxu0 %v506
    %v546 = vpop.f32.mrf.mxu0
    %v547 = vadd.f32 %v492, %v546
    %548 = vmatmul.f32.gmra.mxu0 %v509
    %v549 = vpop.f32.mrf.mxu0
    %v550 = vadd.f32 %v492, %v549
    %551 = vmatmul.f32.gmra.mxu0 %v512
    %v552 = vpop.f32.mrf.mxu0
    %v553 = vadd.f32 %v492, %v552
    %554 = vmatmul.f32.gmra.mxu0 %v515
    %v555 = vpop.f32.mrf.mxu0
    %v556 = vadd.f32 %v492, %v555
    %557 = vdwg.mxu0
    %v558 = vmax.f32 %v225, %v380
    %v559 = vmax.f32 %v228, %v383
    %v560 = vmax.f32 %v231, %v386
    %v561 = vmax.f32 %v234, %v389
    %v562 = vmax.f32 %v237, %v392
    %v563 = vmax.f32 %v240, %v395
    %v564 = vmax.f32 %v243, %v398
    %v565 = vmax.f32 %v246, %v401
    %v566 = vmax.f32 %v558, %v535
    %v567 = vmax.f32 %v559, %v538
    %v568 = vmax.f32 %v560, %v541
    %v569 = vmax.f32 %v561, %v544
    %v570 = vmax.f32 %v562, %v547
    %v571 = vmax.f32 %v563, %v550
    %v572 = vmax.f32 %v564, %v553
    %v573 = vmax.f32 %v565, %v556
    %v574 = vsub.f32 %v225, %v566
    %v575 = vsub.f32 %v228, %v567
    %v576 = vsub.f32 %v231, %v568
    %v577 = vsub.f32 %v234, %v569
    %v578 = vsub.f32 %v237, %v570
    %v579 = vsub.f32 %v240, %v571
    %v580 = vsub.f32 %v243, %v572
    %v581 = vsub.f32 %v246, %v573
    %v582 = vmul.f32 %v574, 1.442695
    %v583 = vpow.pop %v582
    %v584 = vmul.f32 %v575, 1.442695
    %v585 = vpow.pop %v584
    %v586 = vmul.f32 %v576, 1.442695
    %v587 = vpow.pop %v586
    %v588 = vmul.f32 %v577, 1.442695
    %v589 = vpow.pop %v588
    %v590 = vmul.f32 %v578, 1.442695
    %v591 = vpow.pop %v590
    %v592 = vmul.f32 %v579, 1.442695
    %v593 = vpow.pop %v592
    %v594 = vmul.f32 %v580, 1.442695
    %v595 = vpow.pop %v594
    %v596 = vmul.f32 %v581, 1.442695
    %v597 = vpow.pop %v596
    %v598 = vsub.f32 %v380, %v566
    %v599 = vsub.f32 %v383, %v567
    %v600 = vsub.f32 %v386, %v568
    %v601 = vsub.f32 %v389, %v569
    %v602 = vsub.f32 %v392, %v570
    %v603 = vsub.f32 %v395, %v571
    %v604 = vsub.f32 %v398, %v572
    %v605 = vsub.f32 %v401, %v573
    %v606 = vmul.f32 %v598, 1.442695
    %v607 = vpow.pop %v606
    %v608 = vmul.f32 %v599, 1.442695
    %v609 = vpow.pop %v608
    %v610 = vmul.f32 %v600, 1.442695
    %v611 = vpow.pop %v610
    %v612 = vmul.f32 %v601, 1.442695
    %v613 = vpow.pop %v612
    %v614 = vmul.f32 %v602, 1.442695
    %v615 = vpow.pop %v614
    %v616 = vmul.f32 %v603, 1.442695
    %v617 = vpow.pop %v616
    %v618 = vmul.f32 %v604, 1.442695
    %v619 = vpow.pop %v618
    %v620 = vmul.f32 %v605, 1.442695
    %v621 = vpow.pop %v620
    %v622 = vsub.f32 %v535, %v566
    %v623 = vsub.f32 %v538, %v567
    %v624 = vsub.f32 %v541, %v568
    %v625 = vsub.f32 %v544, %v569
    %v626 = vsub.f32 %v547, %v570
    %v627 = vsub.f32 %v550, %v571
    %v628 = vsub.f32 %v553, %v572
    %v629 = vsub.f32 %v556, %v573
    %v630 = vmul.f32 %v622, 1.442695
    %v631 = vpow.pop %v630
    %v632 = vmul.f32 %v623, 1.442695
    %v633 = vpow.pop %v632
    %v634 = vmul.f32 %v624, 1.442695
    %v635 = vpow.pop %v634
    %v636 = vmul.f32 %v625, 1.442695
    %v637 = vpow.pop %v636
    %v638 = vmul.f32 %v626, 1.442695
    %v639 = vpow.pop %v638
    %v640 = vmul.f32 %v627, 1.442695
    %v641 = vpow.pop %v640
    %v642 = vmul.f32 %v628, 1.442695
    %v643 = vpow.pop %v642
    %v644 = vmul.f32 %v629, 1.442695
    %v645 = vpow.pop %v644
    %v646 = vadd.f32 %v583, %v607
    %v647 = vadd.f32 %v585, %v609
    %v648 = vadd.f32 %v587, %v611
    %v649 = vadd.f32 %v589, %v613
    %v650 = vadd.f32 %v591, %v615
    %v651 = vadd.f32 %v593, %v617
    %v652 = vadd.f32 %v595, %v619
    %v653 = vadd.f32 %v597, %v621
    %v654 = vadd.f32 %v646, %v631
    %v655 = vadd.f32 %v647, %v633
    %v656 = vadd.f32 %v648, %v635
    %v657 = vadd.f32 %v649, %v637
    %v658 = vadd.f32 %v650, %v639
    %v659 = vadd.f32 %v651, %v641
    %v660 = vadd.f32 %v652, %v643
    %v661 = vadd.f32 %v653, %v645
    %v662 = vrcp.pop %v654
    %v663 = vmul.f32 %v654, %v662
    %v664 = vsub.f32 1.0, %v663
    %v665 = vmul.f32 %v662, %v664
    %v666 = vadd.f32 %v662, %v665
    %vm667 = vweird.f32 %v654
    %vm668 = vweird.f32 %v662
    %vm669 = vmor %vm667, %vm668
    %v670 = vsel %vm669, %v662, %v666
    %v671 = vand.u32 2147483647, %v654
    %vm672 = vcmp.eq.f32.partialorder %v671, 8.507059e+37
    %v673 = vand.u32 %v654, 2147483648
    %v674 = vor.u32 1.1754944e-38, %v673
    %v675 = vsel %vm672, %v674, %v670
    %v676 = vrcp.pop %v655
    %v677 = vmul.f32 %v655, %v676
    %v678 = vsub.f32 1.0, %v677
    %v679 = vmul.f32 %v676, %v678
    %v680 = vadd.f32 %v676, %v679
    %vm681 = vweird.f32 %v655
    %vm682 = vweird.f32 %v676
    %vm683 = vmor %vm681, %vm682
    %v684 = vsel %vm683, %v676, %v680
    %v685 = vand.u32 2147483647, %v655
    %vm686 = vcmp.eq.f32.partialorder %v685, 8.507059e+37
    %v687 = vand.u32 %v655, 2147483648
    %v688 = vor.u32 1.1754944e-38, %v687
    %v689 = vsel %vm686, %v688, %v684
    %v690 = vrcp.pop %v656
    %v691 = vmul.f32 %v656, %v690
    %v692 = vsub.f32 1.0, %v691
    %v693 = vmul.f32 %v690, %v692
    %v694 = vadd.f32 %v690, %v693
    %vm695 = vweird.f32 %v656
    %vm696 = vweird.f32 %v690
    %vm697 = vmor %vm695, %vm696
    %v698 = vsel %vm697, %v690, %v694
    %v699 = vand.u32 2147483647, %v656
    %vm700 = vcmp.eq.f32.partialorder %v699, 8.507059e+37
    %v701 = vand.u32 %v656, 2147483648
    %v702 = vor.u32 1.1754944e-38, %v701
    %v703 = vsel %vm700, %v702, %v698
    %v704 = vrcp.pop %v657
    %v705 = vmul.f32 %v657, %v704
    %v706 = vsub.f32 1.0, %v705
    %v707 = vmul.f32 %v704, %v706
    %v708 = vadd.f32 %v704, %v707
    %vm709 = vweird.f32 %v657
    %vm710 = vweird.f32 %v704
    %vm711 = vmor %vm709, %vm710
    %v712 = vsel %vm711, %v704, %v708
    %v713 = vand.u32 2147483647, %v657
    %vm714 = vcmp.eq.f32.partialorder %v713, 8.507059e+37
    %v715 = vand.u32 %v657, 2147483648
    %v716 = vor.u32 1.1754944e-38, %v715
    %v717 = vsel %vm714, %v716, %v712
    %v718 = vrcp.pop %v658
    %v719 = vmul.f32 %v658, %v718
    %v720 = vsub.f32 1.0, %v719
    %v721 = vmul.f32 %v718, %v720
    %v722 = vadd.f32 %v718, %v721
    %vm723 = vweird.f32 %v658
    %vm724 = vweird.f32 %v718
    %vm725 = vmor %vm723, %vm724
    %v726 = vsel %vm725, %v718, %v722
    %v727 = vand.u32 2147483647, %v658
    %vm728 = vcmp.eq.f32.partialorder %v727, 8.507059e+37
    %v729 = vand.u32 %v658, 2147483648
    %v730 = vor.u32 1.1754944e-38, %v729
    %v731 = vsel %vm728, %v730, %v726
    %v732 = vrcp.pop %v659
    %v733 = vmul.f32 %v659, %v732
    %v734 = vsub.f32 1.0, %v733
    %v735 = vmul.f32 %v732, %v734
    %v736 = vadd.f32 %v732, %v735
    %vm737 = vweird.f32 %v659
    %vm738 = vweird.f32 %v732
    %vm739 = vmor %vm737, %vm738
    %v740 = vsel %vm739, %v732, %v736
    %v741 = vand.u32 2147483647, %v659
    %vm742 = vcmp.eq.f32.partialorder %v741, 8.507059e+37
    %v743 = vand.u32 %v659, 2147483648
    %v744 = vor.u32 1.1754944e-38, %v743
    %v745 = vsel %vm742, %v744, %v740
    %v746 = vrcp.pop %v660
    %v747 = vmul.f32 %v660, %v746
    %v748 = vsub.f32 1.0, %v747
    %v749 = vmul.f32 %v746, %v748
    %v750 = vadd.f32 %v746, %v749
    %vm751 = vweird.f32 %v660
    %vm752 = vweird.f32 %v746
    %vm753 = vmor %vm751, %vm752
    %v754 = vsel %vm753, %v746, %v750
    %v755 = vand.u32 2147483647, %v660
    %vm756 = vcmp.eq.f32.partialorder %v755, 8.507059e+37
    %v757 = vand.u32 %v660, 2147483648
    %v758 = vor.u32 1.1754944e-38, %v757
    %v759 = vsel %vm756, %v758, %v754
    %v760 = vrcp.pop %v661
    %v761 = vmul.f32 %v661, %v760
    %v762 = vsub.f32 1.0, %v761
    %v763 = vmul.f32 %v760, %v762
    %v764 = vadd.f32 %v760, %v763
    %vm765 = vweird.f32 %v661
    %vm766 = vweird.f32 %v760
    %vm767 = vmor %vm765, %vm766
    %v768 = vsel %vm767, %v760, %v764
    %v769 = vand.u32 2147483647, %v661
    %vm770 = vcmp.eq.f32.partialorder %v769, 8.507059e+37
    %v771 = vand.u32 %v661, 2147483648
    %v772 = vor.u32 1.1754944e-38, %v771
    %v773 = vsel %vm770, %v772, %v768
    %v774 = vmul.f32 %v583, %v675
    %v775 = vmul.f32 %v585, %v689
    %v776 = vmul.f32 %v587, %v703
    %v777 = vmul.f32 %v589, %v717
    %v778 = vmul.f32 %v591, %v731
    %v779 = vmul.f32 %v593, %v745
    %v780 = vmul.f32 %v595, %v759
    %v781 = vmul.f32 %v597, %v773
    %783 = vset.pattern.permute.xlu0 0
    %784 = vperm.xlu0 %783, %v774
    %v785 = vpop.permute.xlu0 %784
    %788 = vset.pattern.permute.xlu0 0
    %789 = vperm.xlu0 %788, %v775
    %v790 = vpop.permute.xlu0 %789
    %793 = vset.pattern.permute.xlu0 0
    %794 = vperm.xlu0 %793, %v776
    %v795 = vpop.permute.xlu0 %794
    %798 = vset.pattern.permute.xlu0 0
    %799 = vperm.xlu0 %798, %v777
    %v800 = vpop.permute.xlu0 %799
    %803 = vset.pattern.permute.xlu0 0
    %804 = vperm.xlu0 %803, %v778
    %v805 = vpop.permute.xlu0 %804
    %808 = vset.pattern.permute.xlu0 0
    %809 = vperm.xlu0 %808, %v779
    %v810 = vpop.permute.xlu0 %809
    %813 = vset.pattern.permute.xlu0 0
    %814 = vperm.xlu0 %813, %v780
    %v815 = vpop.permute.xlu0 %814
    %818 = vset.pattern.permute.xlu0 0
    %819 = vperm.xlu0 %818, %v781
    %v820 = vpop.permute.xlu0 %819
    %v822 = vmul.f32 %v53, %v785
    %v823 = vmul.f32 %v54, %v790
    %v824 = vmul.f32 %v55, %v795
    %v825 = vmul.f32 %v56, %v800
    %v826 = vmul.f32 %v57, %v805
    %v827 = vmul.f32 %v58, %v810
    %v828 = vmul.f32 %v59, %v815
    %v829 = vmul.f32 %v60, %v820
    %v830 = vmul.f32 %v607, %v675
    %v831 = vmul.f32 %v609, %v689
    %v832 = vmul.f32 %v611, %v703
    %v833 = vmul.f32 %v613, %v717
    %v834 = vmul.f32 %v615, %v731
    %v835 = vmul.f32 %v617, %v745
    %v836 = vmul.f32 %v619, %v759
    %v837 = vmul.f32 %v621, %v773
    %839 = vset.pattern.permute.xlu0 0
    %840 = vperm.xlu0 %839, %v830
    %v841 = vpop.permute.xlu0 %840
    %844 = vset.pattern.permute.xlu0 0
    %845 = vperm.xlu0 %844, %v831
    %v846 = vpop.permute.xlu0 %845
    %849 = vset.pattern.permute.xlu0 0
    %850 = vperm.xlu0 %849, %v832
    %v851 = vpop.permute.xlu0 %850
    %854 = vset.pattern.permute.xlu0 0
    %855 = vperm.xlu0 %854, %v833
    %v856 = vpop.permute.xlu0 %855
    %859 = vset.pattern.permute.xlu0 0
    %860 = vperm.xlu0 %859, %v834
    %v861 = vpop.permute.xlu0 %860
    %864 = vset.pattern.permute.xlu0 0
    %865 = vperm.xlu0 %864, %v835
    %v866 = vpop.permute.xlu0 %865
    %869 = vset.pattern.permute.xlu0 0
    %870 = vperm.xlu0 %869, %v836
    %v871 = vpop.permute.xlu0 %870
    %874 = vset.pattern.permute.xlu0 0
    %875 = vperm.xlu0 %874, %v837
    %v876 = vpop.permute.xlu0 %875
    %v878 = vmul.f32 %v70, %v841
    %v879 = vmul.f32 %v71, %v846
    %v880 = vmul.f32 %v72, %v851
    %v881 = vmul.f32 %v73, %v856
    %v882 = vmul.f32 %v74, %v861
    %v883 = vmul.f32 %v75, %v866
    %v884 = vmul.f32 %v76, %v871
    %v885 = vmul.f32 %v77, %v876
    %v886 = vadd.f32 %v822, %v878
    %v887 = vadd.f32 %v823, %v879
    %v888 = vadd.f32 %v824, %v880
    %v889 = vadd.f32 %v825, %v881
    %v890 = vadd.f32 %v826, %v882
    %v891 = vadd.f32 %v827, %v883
    %v892 = vadd.f32 %v828, %v884
    %v893 = vadd.f32 %v829, %v885
    %v894 = vmul.f32 %v631, %v675
    %v895 = vmul.f32 %v633, %v689
    %v896 = vmul.f32 %v635, %v703
    %v897 = vmul.f32 %v637, %v717
    %v898 = vmul.f32 %v639, %v731
    %v899 = vmul.f32 %v641, %v745
    %v900 = vmul.f32 %v643, %v759
    %v901 = vmul.f32 %v645, %v773
    %903 = vset.pattern.permute.xlu0 0
    %904 = vperm.xlu0 %903, %v894
    %v905 = vpop.permute.xlu0 %904
    %908 = vset.pattern.permute.xlu0 0
    %909 = vperm.xlu0 %908, %v895
    %v910 = vpop.permute.xlu0 %909
    %913 = vset.pattern.permute.xlu0 0
    %914 = vperm.xlu0 %913, %v896
    %v915 = vpop.permute.xlu0 %914
    %918 = vset.pattern.permute.xlu0 0
    %919 = vperm.xlu0 %918, %v897
    %v920 = vpop.permute.xlu0 %919
    %923 = vset.pattern.permute.xlu0 0
    %924 = vperm.xlu0 %923, %v898
    %v925 = vpop.permute.xlu0 %924
    %928 = vset.pattern.permute.xlu0 0
    %929 = vperm.xlu0 %928, %v899
    %v930 = vpop.permute.xlu0 %929
    %933 = vset.pattern.permute.xlu0 0
    %934 = vperm.xlu0 %933, %v900
    %v935 = vpop.permute.xlu0 %934
    %938 = vset.pattern.permute.xlu0 0
    %939 = vperm.xlu0 %938, %v901
    %v940 = vpop.permute.xlu0 %939
    %v942 = vmul.f32 %v87, %v905
    %v943 = vmul.f32 %v88, %v910
    %v944 = vmul.f32 %v89, %v915
    %v945 = vmul.f32 %v90, %v920
    %v946 = vmul.f32 %v91, %v925
    %v947 = vmul.f32 %v92, %v930
    %v948 = vmul.f32 %v93, %v935
    %v949 = vmul.f32 %v94, %v940
    %v950 = vadd.f32 %v886, %v942
    %v951 = vadd.f32 %v887, %v943
    %v952 = vadd.f32 %v888, %v944
    %v953 = vadd.f32 %v889, %v945
    %v954 = vadd.f32 %v890, %v946
    %v955 = vadd.f32 %v891, %v947
    %v956 = vadd.f32 %v892, %v948
    %v957 = vadd.f32 %v893, %v949
    %v958 = vld [vmem:[%s5] sm:$0xff]
    %v959 = vld [vmem:[%s5 + $0x8] sm:$0xff]
    %v960 = vld [vmem:[%s5 + $0x10] sm:$0xff]
    %v961 = vld [vmem:[%s5 + $0x18] sm:$0xff]
    %v962 = vld [vmem:[%s6] sm:$0x1]
    %v964 = vperm.slane %v962, 0
    %v967 = vsel %vm103, %v950, 0
    %v970 = vsel %vm103, %v951, 0
    %v973 = vsel %vm103, %v952, 0
    %v976 = vsel %vm103, %v953, 0
    %v979 = vsel %vm103, %v954, 0
    %v982 = vsel %vm103, %v955, 0
    %v985 = vsel %vm103, %v956, 0
    %v988 = vsel %vm103, %v957, 0
    %990 = vmatpush.msra.mxu0 0.0
    %991 = vmatpush.msra.mxu0 0.0
    %992 = vmatpush.msra.mxu0 0.0
    %993 = vmatpush.msra.mxu0 0.0
    %994 = vmatpush.msra.mxu0 0.0
    %995 = vmatpush.msra.mxu0 0.0
    %996 = vmatpush.msra.mxu0 0.0
    %997 = vmatpush.msra.mxu0 0.0
    %998 = vmatpush.msra.mxu0 0.0
    %999 = vmatpush.msra.mxu0 0.0
    %1000 = vmatpush.msra.mxu0 0.0
    %1001 = vmatpush.msra.mxu0 0.0
    %1002 = vmatpush.msra.mxu0 %v961
    %1003 = vmatpush.msra.mxu0 %v960
    %1004 = vmatpush.msra.mxu0 %v959
    %1005 = vmatpush.msra.mxu0 %v958
    %1006 = vmatmul.f32.gmra.mxu0 %v967
    %v1007 = vpop.f32.mrf.mxu0
    %v1008 = vadd.f32 %v964, %v1007
    %1009 = vmatmul.f32.gmra.mxu0 %v970
    %v1010 = vpop.f32.mrf.mxu0
    %v1011 = vadd.f32 %v964, %v1010
    %1012 = vmatmul.f32.gmra.mxu0 %v973
    %v1013 = vpop.f32.mrf.mxu0
    %v1014 = vadd.f32 %v964, %v1013
    %1015 = vmatmul.f32.gmra.mxu0 %v976
    %v1016 = vpop.f32.mrf.mxu0
    %v1017 = vadd.f32 %v964, %v1016
    %1018 = vmatmul.f32.gmra.mxu0 %v979
    %v1019 = vpop.f32.mrf.mxu0
    %v1020 = vadd.f32 %v964, %v1019
    %1021 = vmatmul.f32.gmra.mxu0 %v982
    %v1022 = vpop.f32.mrf.mxu0
    %v1023 = vadd.f32 %v964, %v1022
    %1024 = vmatmul.f32.gmra.mxu0 %v985
    %v1025 = vpop.f32.mrf.mxu0
    %v1026 = vadd.f32 %v964, %v1025
    %1027 = vmatmul.f32.gmra.mxu0 %v988
    %v1028 = vpop.f32.mrf.mxu0
    %v1029 = vadd.f32 %v964, %v1028
    %1030 = vdwg.mxu0
    %v1031 = vsel %vm103, %v1008, 0.0
    %1032 = vadd.xlane.f32.xlu0 %v1031
    %v1033 = vpop.xlane.xlu0 %1032
    %v1034 = vsel %vm103, %v1011, 0.0
    %1035 = vadd.xlane.f32.xlu0 %v1034
    %v1036 = vpop.xlane.xlu0 %1035
    %v1037 = vsel %vm103, %v1014, 0.0
    %1038 = vadd.xlane.f32.xlu0 %v1037
    %v1039 = vpop.xlane.xlu0 %1038
    %v1040 = vsel %vm103, %v1017, 0.0
    %1041 = vadd.xlane.f32.xlu0 %v1040
    %v1042 = vpop.xlane.xlu0 %1041
    %v1043 = vsel %vm103, %v1020, 0.0
    %1044 = vadd.xlane.f32.xlu0 %v1043
    %v1045 = vpop.xlane.xlu0 %1044
    %v1046 = vsel %vm103, %v1023, 0.0
    %1047 = vadd.xlane.f32.xlu0 %v1046
    %v1048 = vpop.xlane.xlu0 %1047
    %v1049 = vsel %vm103, %v1026, 0.0
    %1050 = vadd.xlane.f32.xlu0 %v1049
    %v1051 = vpop.xlane.xlu0 %1050
    %v1052 = vsel %vm103, %v1029, 0.0
    %1053 = vadd.xlane.f32.xlu0 %v1052
    %v1054 = vpop.xlane.xlu0 %1053
    %v1055 = vrcp.pop 32.0
    %v1056 = vmul.f32 32.0, %v1055
    %v1057 = vsub.f32 1.0, %v1056
    %v1058 = vmul.f32 %v1055, %v1057
    %v1059 = vadd.f32 %v1055, %v1058
    %vm1060 = vweird.f32 %v1055
    %v1061 = vsel %vm1060, %v1055, %v1059
    %v1062 = vmul.f32 %v1033, %v1061
    %v1063 = vmul.f32 %v1036, %v1061
    %v1064 = vmul.f32 %v1039, %v1061
    %v1065 = vmul.f32 %v1042, %v1061
    %v1066 = vmul.f32 %v1045, %v1061
    %v1067 = vmul.f32 %v1048, %v1061
    %v1068 = vmul.f32 %v1051, %v1061
    %v1069 = vmul.f32 %v1054, %v1061
    %v1070 = vmul.f32 %v1008, %v1008
    %v1071 = vmul.f32 %v1011, %v1011
    %v1072 = vmul.f32 %v1014, %v1014
    %v1073 = vmul.f32 %v1017, %v1017
    %v1074 = vmul.f32 %v1020, %v1020
    %v1075 = vmul.f32 %v1023, %v1023
    %v1076 = vmul.f32 %v1026, %v1026
    %v1077 = vmul.f32 %v1029, %v1029
    %v1078 = vsel %vm103, %v1070, 0.0
    %1079 = vadd.xlane.f32.xlu0 %v1078
    %v1080 = vpop.xlane.xlu0 %1079
    %v1081 = vsel %vm103, %v1071, 0.0
    %1082 = vadd.xlane.f32.xlu0 %v1081
    %v1083 = vpop.xlane.xlu0 %1082
    %v1084 = vsel %vm103, %v1072, 0.0
    %1085 = vadd.xlane.f32.xlu0 %v1084
    %v1086 = vpop.xlane.xlu0 %1085
    %v1087 = vsel %vm103, %v1073, 0.0
    %1088 = vadd.xlane.f32.xlu0 %v1087
    %v1089 = vpop.xlane.xlu0 %1088
    %v1090 = vsel %vm103, %v1074, 0.0
    %1091 = vadd.xlane.f32.xlu0 %v1090
    %v1092 = vpop.xlane.xlu0 %1091
    %v1093 = vsel %vm103, %v1075, 0.0
    %1094 = vadd.xlane.f32.xlu0 %v1093
    %v1095 = vpop.xlane.xlu0 %1094
    %v1096 = vsel %vm103, %v1076, 0.0
    %1097 = vadd.xlane.f32.xlu0 %v1096
    %v1098 = vpop.xlane.xlu0 %1097
    %v1099 = vsel %vm103, %v1077, 0.0
    %1100 = vadd.xlane.f32.xlu0 %v1099
    %v1101 = vpop.xlane.xlu0 %1100
    %v1102 = vmul.f32 %v1080, %v1061
    %v1103 = vmul.f32 %v1083, %v1061
    %v1104 = vmul.f32 %v1086, %v1061
    %v1105 = vmul.f32 %v1089, %v1061
    %v1106 = vmul.f32 %v1092, %v1061
    %v1107 = vmul.f32 %v1095, %v1061
    %v1108 = vmul.f32 %v1098, %v1061
    %v1109 = vmul.f32 %v1101, %v1061
    %v1110 = vsub.f32 %v1008, %v1062
    %v1111 = vsub.f32 %v1011, %v1063
    %v1112 = vsub.f32 %v1014, %v1064
    %v1113 = vsub.f32 %v1017, %v1065
    %v1114 = vsub.f32 %v1020, %v1066
    %v1115 = vsub.f32 %v1023, %v1067
    %v1116 = vsub.f32 %v1026, %v1068
    %v1117 = vsub.f32 %v1029, %v1069
    %v1118 = vmul.f32 %v1062, %v1062
    %v1119 = vmul.f32 %v1063, %v1063
    %v1120 = vmul.f32 %v1064, %v1064
    %v1121 = vmul.f32 %v1065, %v1065
    %v1122 = vmul.f32 %v1066, %v1066
    %v1123 = vmul.f32 %v1067, %v1067
    %v1124 = vmul.f32 %v1068, %v1068
    %v1125 = vmul.f32 %v1069, %v1069
    %v1126 = vsub.f32 %v1102, %v1118
    %v1127 = vsub.f32 %v1103, %v1119
    %v1128 = vsub.f32 %v1104, %v1120
    %v1129 = vsub.f32 %v1105, %v1121
    %v1130 = vsub.f32 %v1106, %v1122
    %v1131 = vsub.f32 %v1107, %v1123
    %v1132 = vsub.f32 %v1108, %v1124
    %v1133 = vsub.f32 %v1109, %v1125
    %v1134 = vadd.f32 %v1126, 1e-05
    %v1135 = vadd.f32 %v1127, 1e-05
    %v1136 = vadd.f32 %v1128, 1e-05
    %v1137 = vadd.f32 %v1129, 1e-05
    %v1138 = vadd.f32 %v1130, 1e-05
    %v1139 = vadd.f32 %v1131, 1e-05
    %v1140 = vadd.f32 %v1132, 1e-05
    %v1141 = vadd.f32 %v1133, 1e-05
    %v1142 = vrsqrt.pop %v1134
    %v1143 = vmul.f32 %v1142, %v1134
    %v1144 = vmul.f32 %v1143, %v1142
    %v1145 = vmul.f32 0.5, %v1144
    %v1146 = vsub.f32 1.5, %v1145
    %v1147 = vmul.f32 %v1142, %v1146
    %vm1148 = vweird.f32 %v1134
    %vm1149 = vweird.f32 %v1142
    %vm1150 = vmor %vm1148, %vm1149
    %v1151 = vsel %vm1150, %v1142, %v1147
    %v1152 = vrsqrt.pop %v1135
    %v1153 = vmul.f32 %v1152, %v1135
    %v1154 = vmul.f32 %v1153, %v1152
    %v1155 = vmul.f32 0.5, %v1154
    %v1156 = vsub.f32 1.5, %v1155
    %v1157 = vmul.f32 %v1152, %v1156
    %vm1158 = vweird.f32 %v1135
    %vm1159 = vweird.f32 %v1152
    %vm1160 = vmor %vm1158, %vm1159
    %v1161 = vsel %vm1160, %v1152, %v1157
    %v1162 = vrsqrt.pop %v1136
    %v1163 = vmul.f32 %v1162, %v1136
    %v1164 = vmul.f32 %v1163, %v1162
    %v1165 = vmul.f32 0.5, %v1164
    %v1166 = vsub.f32 1.5, %v1165
    %v1167 = vmul.f32 %v1162, %v1166
    %vm1168 = vweird.f32 %v1136
    %vm1169 = vweird.f32 %v1162
    %vm1170 = vmor %vm1168, %vm1169
    %v1171 = vsel %vm1170, %v1162, %v1167
    %v1172 = vrsqrt.pop %v1137
    %v1173 = vmul.f32 %v1172, %v1137
    %v1174 = vmul.f32 %v1173, %v1172
    %v1175 = vmul.f32 0.5, %v1174
    %v1176 = vsub.f32 1.5, %v1175
    %v1177 = vmul.f32 %v1172, %v1176
    %vm1178 = vweird.f32 %v1137
    %vm1179 = vweird.f32 %v1172
    %vm1180 = vmor %vm1178, %vm1179
    %v1181 = vsel %vm1180, %v1172, %v1177
    %v1182 = vrsqrt.pop %v1138
    %v1183 = vmul.f32 %v1182, %v1138
    %v1184 = vmul.f32 %v1183, %v1182
    %v1185 = vmul.f32 0.5, %v1184
    %v1186 = vsub.f32 1.5, %v1185
    %v1187 = vmul.f32 %v1182, %v1186
    %vm1188 = vweird.f32 %v1138
    %vm1189 = vweird.f32 %v1182
    %vm1190 = vmor %vm1188, %vm1189
    %v1191 = vsel %vm1190, %v1182, %v1187
    %v1192 = vrsqrt.pop %v1139
    %v1193 = vmul.f32 %v1192, %v1139
    %v1194 = vmul.f32 %v1193, %v1192
    %v1195 = vmul.f32 0.5, %v1194
    %v1196 = vsub.f32 1.5, %v1195
    %v1197 = vmul.f32 %v1192, %v1196
    %vm1198 = vweird.f32 %v1139
    %vm1199 = vweird.f32 %v1192
    %vm1200 = vmor %vm1198, %vm1199
    %v1201 = vsel %vm1200, %v1192, %v1197
    %v1202 = vrsqrt.pop %v1140
    %v1203 = vmul.f32 %v1202, %v1140
    %v1204 = vmul.f32 %v1203, %v1202
    %v1205 = vmul.f32 0.5, %v1204
    %v1206 = vsub.f32 1.5, %v1205
    %v1207 = vmul.f32 %v1202, %v1206
    %vm1208 = vweird.f32 %v1140
    %vm1209 = vweird.f32 %v1202
    %vm1210 = vmor %vm1208, %vm1209
    %v1211 = vsel %vm1210, %v1202, %v1207
    %v1212 = vrsqrt.pop %v1141
    %v1213 = vmul.f32 %v1212, %v1141
    %v1214 = vmul.f32 %v1213, %v1212
    %v1215 = vmul.f32 0.5, %v1214
    %v1216 = vsub.f32 1.5, %v1215
    %v1217 = vmul.f32 %v1212, %v1216
    %vm1218 = vweird.f32 %v1141
    %vm1219 = vweird.f32 %v1212
    %vm1220 = vmor %vm1218, %vm1219
    %v1221 = vsel %vm1220, %v1212, %v1217
    %v1222 = vmul.f32 %v1110, %v1151
    %v1223 = vmul.f32 %v1111, %v1161
    %v1224 = vmul.f32 %v1112, %v1171
    %v1225 = vmul.f32 %v1113, %v1181
    %v1226 = vmul.f32 %v1114, %v1191
    %v1227 = vmul.f32 %v1115, %v1201
    %v1228 = vmul.f32 %v1116, %v1211
    %v1229 = vmul.f32 %v1117, %v1221
    %v1230 = vld [vmem:[%s7] sm:$0x1]
    %v1232 = vperm.slane %v1230, 0
    %v1234 = vmul.f32 %v1222, %v1232
    %v1235 = vmul.f32 %v1223, %v1232
    %v1236 = vmul.f32 %v1224, %v1232
    %v1237 = vmul.f32 %v1225, %v1232
    %v1238 = vmul.f32 %v1226, %v1232
    %v1239 = vmul.f32 %v1227, %v1232
    %v1240 = vmul.f32 %v1228, %v1232
    %v1241 = vmul.f32 %v1229, %v1232
    %v1242 = vld [vmem:[%s8] sm:$0x1]
    %v1244 = vperm.slane %v1242, 0
    %v1246 = vadd.f32 %v1234, %v1244
    %v1247 = vadd.f32 %v1235, %v1244
    %v1248 = vadd.f32 %v1236, %v1244
    %v1249 = vadd.f32 %v1237, %v1244
    %v1250 = vadd.f32 %v1238, %v1244
    %v1251 = vadd.f32 %v1239, %v1244
    %v1252 = vadd.f32 %v1240, %v1244
    %v1253 = vadd.f32 %v1241, %v1244
    %v1254 = vmax.f32 %v1246, 0.0
    %v1255 = vmax.f32 %v1247, 0.0
    %v1256 = vmax.f32 %v1248, 0.0
    %v1257 = vmax.f32 %v1249, 0.0
    %v1258 = vmax.f32 %v1250, 0.0
    %v1259 = vmax.f32 %v1251, 0.0
    %v1260 = vmax.f32 %v1252, 0.0
    %v1261 = vmax.f32 %v1253, 0.0
    %1262 = vst.msk [vmem:[%s9] sm:$0xff] %vm103, %v1254
    %1263 = vst.msk [vmem:[%s9 + $0x8] sm:$0xff] %vm103, %v1255
    %1264 = vst.msk [vmem:[%s9 + $0x10] sm:$0xff] %vm103, %v1256
    %1265 = vst.msk [vmem:[%s9 + $0x18] sm:$0xff] %vm103, %v1257
    %1266 = vst.msk [vmem:[%s9 + $0x20] sm:$0xff] %vm103, %v1258
    %1267 = vst.msk [vmem:[%s9 + $0x28] sm:$0xff] %vm103, %v1259
    %1268 = vst.msk [vmem:[%s9 + $0x30] sm:$0xff] %vm103, %v1260
    %1269 = vst.msk [vmem:[%s9 + $0x38] sm:$0xff] %vm103, %v1261
    // Predicated region
    $region42: #{tpu_custom_call.1} parent=1 // pred_check
      _
    $region43: #{tpu_custom_call.1} parent=1 // pred_check_branch
      %1271 = sbr.rel (0) target = $region45
    $region44: #{tpu_custom_call.1} parent=1 // pred_region
      _
    $region45: #{tpu_custom_call.1} parent=1 // pred_fallthru
      _
    // Predicated region
    $region46: #{tpu_custom_call.1} parent=1 // pred_check
      _
    $region47: #{tpu_custom_call.1} parent=1 // pred_check_branch
      %1273 = sbr.rel (0) target = $region49
    $region48: #{tpu_custom_call.1} parent=1 // pred_region
      _
    $region49: #{tpu_custom_call.1} parent=1 // pred_fallthru
      _
    %1274 = vsyncpa [#allocation3], 1

</llo_original>
